<compile_context>
chip_gen: v5e
topology: v5e:2x2
jax: 0.10.0
libtpu: 0.0.40
codegen_flags: <defaults>
</compile_context>

<pallas_src>
import functools

import jax
import jax.numpy as jnp
from jax.experimental import pallas as pl
from jax.experimental.pallas import tpu as pltpu


def _round_up(n, m):
    return ((n + m - 1) // m) * m


def _gru_unit_cluster_kernel(y_ref, x_ref, wx_ref, wy_ref, wyn_ref, b_ref,
                             out_ref):
    """One fused GRU_unit_cluster cell.

    y_ref   : (B, Lp)    y_i, zero-padded from latent_dim L to Lp (lane mult.)
    x_ref   : (B, D)     x
    wx_ref  : (D, 3*Lp)  x-projections for [update | reset | new], lane-padded
    wy_ref  : (Lp, 2*Lp) y-projections for [update | reset]
    wyn_ref : (Lp, Lp)   y-projection of new_state_net (applied to y * reset)
    b_ref   : (1, 3*Lp)  pre-combined biases [b_update | b_reset | b_new]
    out_ref : (B, Lp)    new_y_probs, lane-padded
    """
    Lp = y_ref.shape[1]
    y = y_ref[...]
    x = x_ref[...]

    # All x-projections + all biases in a single MXU call.
    gx = (jnp.dot(x, wx_ref[...], preferred_element_type=jnp.float32)
          + b_ref[...])                                       # (B, 3*Lp)
    # update / reset y-projections in a single MXU call.
    gy = jnp.dot(y, wy_ref[...], preferred_element_type=jnp.float32)  # (B, 2*Lp)

    u = jax.nn.sigmoid(gx[:, 0:Lp] + gy[:, 0:Lp])             # update gate
    r = jax.nn.sigmoid(gx[:, Lp:2 * Lp] + gy[:, Lp:2 * Lp])   # reset gate

    # new_state_net(cat([y * r, x])) == (y * r) @ Wn_y + x @ Wn_x + b_n
    n = gx[:, 2 * Lp:3 * Lp] + jnp.dot(
        y * r, wyn_ref[...], preferred_element_type=jnp.float32)

    # TODO(synk): torch.isnan assert has no in-graph equivalent; omitted.
    out_ref[...] = (1.0 - u) * n + u * y


def init_params(key, latent_dim, input_dim):
    """Synthetic parameters in PyTorch nn.Linear layout: W (out, in), b (out,)."""
    L, D = latent_dim, input_dim
    fan_in = L + D
    ks = jax.random.split(key, 6)

    def u(k, shape):
        bound = 1.0 / jnp.sqrt(jnp.float32(fan_in))
        return jax.random.uniform(k, shape, jnp.float32, -bound, bound)

    return {
        "w_update": u(ks[0], (L, L + D)), "b_update": u(ks[1], (L,)),
        "w_reset":  u(ks[2], (L, L + D)), "b_reset":  u(ks[3], (L,)),
        "w_new":    u(ks[4], (L, L + D)), "b_new":    u(ks[5], (L,)),
    }


def pack_params(params):
    """Split each Linear into y/x parts, transpose to (in, out), lane-pad,
    and stack so the kernel does two fused matmuls. Called once, outside jit."""
    L = params["w_update"].shape[0]
    Lp = _round_up(L, 128)

    def split_t(w):                       # w: (L, L + D), PyTorch layout
        wy = w[:, :L].T                   # (L, L)  y-projection, (in, out)
        wx = w[:, L:].T                   # (D, L)  x-projection, (in, out)
        wy = jnp.pad(wy, ((0, Lp - L), (0, Lp - L)))
        wx = jnp.pad(wx, ((0, 0), (0, Lp - L)))
        return wy, wx

    wu_y, wu_x = split_t(params["w_update"])
    wr_y, wr_x = split_t(params["w_reset"])
    wn_y, wn_x = split_t(params["w_new"])

    def padb(b):
        return jnp.pad(b, (0, Lp - L))

    return {
        "wx_urn": jnp.concatenate([wu_x, wr_x, wn_x], axis=1),   # (D, 3*Lp)
        "wy_ur":  jnp.concatenate([wu_y, wr_y], axis=1),         # (Lp, 2*Lp)
        "wy_n":   wn_y,                                          # (Lp, Lp)
        "b_urn":  jnp.concatenate(
            [padb(params["b_update"]), padb(params["b_reset"]),
             padb(params["b_new"])])[None, :],                   # (1, 3*Lp)
    }


@jax.jit
def gru_unit_cluster_forward(y_i, x, packed):
    """y_i: (B, latent_dim), x: (B, input_dim) -> new_y_probs (B, latent_dim)."""
    B, L = y_i.shape
    D = x.shape[1]
    Lp = packed["wy_n"].shape[0]

    y_pad = jnp.pad(y_i.astype(jnp.float32), ((0, 0), (0, Lp - L)))
    x = x.astype(jnp.float32)

    flops = 2 * B * D * 3 * Lp + 2 * B * Lp * 2 * Lp + 2 * B * Lp * Lp
    bytes_accessed = 4 * (2 * B * Lp + B * D + D * 3 * Lp + 2 * Lp * Lp
                          + Lp * Lp + 3 * Lp)

    vmem = pl.BlockSpec(memory_space=pltpu.MemorySpace.VMEM)
    out = pl.pallas_call(
        _gru_unit_cluster_kernel,
        out_shape=jax.ShapeDtypeStruct((B, Lp), jnp.float32),
        in_specs=[vmem] * 6,
        out_specs=vmem,
        cost_estimate=pl.CostEstimate(
            flops=flops, transcendentals=2 * B * Lp,
            bytes_accessed=bytes_accessed),
    )(y_pad, x, packed["wx_urn"], packed["wy_ur"], packed["wy_n"],
      packed["b_urn"])

    return out[:, :L]                     # strip lane padding (free in wrapper)


def reference_forward(y_i, x, params):
    """Pure-JAX reference matching the PyTorch forward exactly."""
    hi = jax.lax.Precision.HIGHEST
    yc = jnp.concatenate([y_i, x], axis=-1)
    u = jax.nn.sigmoid(
        jnp.dot(yc, params["w_update"].T, precision=hi) + params["b_update"])
    r = jax.nn.sigmoid(
        jnp.dot(yc, params["w_reset"].T, precision=hi) + params["b_reset"])
    cc = jnp.concatenate([y_i * r, x], axis=-1)
    n = jnp.dot(cc, params["w_new"].T, precision=hi) + params["b_new"]
    return (1.0 - u) * n + u * y_i


if __name__ == "__main__":
    B = 8             # batch (fills vreg sublanes)
    latent_dim = 20
    input_dim = 10

    key = jax.random.PRNGKey(0)
    k_y, k_x, k_p = jax.random.split(key, 3)
    y_i = jax.random.normal(k_y, (B, latent_dim), jnp.float32)
    x = jax.random.normal(k_x, (B, input_dim), jnp.float32)

    params = init_params(k_p, latent_dim, input_dim)
    packed = pack_params(params)          # one-time weight packing

    out = gru_unit_cluster_forward(y_i, x, packed)
    out = jax.block_until_ready(out)

    assert out.shape == (B, latent_dim), out.shape
    assert bool(jnp.all(jnp.isfinite(out)))

    ref = reference_forward(y_i, x, params)
    max_err = float(jnp.max(jnp.abs(out - ref)))
    assert bool(jnp.allclose(out, ref, rtol=1e-3, atol=1e-3)), max_err

    print("KERNEL_OK")
</pallas_src>

<mosaic_0001>
module attributes {stable_mosaic.version = 11 : i64} {
  func.func @_gru_unit_cluster_kernel(%arg0: memref<8x128xf32, #tpu.memory_space<vmem>>, %arg1: memref<8x10xf32, #tpu.memory_space<vmem>>, %arg2: memref<10x384xf32, #tpu.memory_space<vmem>>, %arg3: memref<128x256xf32, #tpu.memory_space<vmem>>, %arg4: memref<128x128xf32, #tpu.memory_space<vmem>>, %arg5: memref<1x384xf32, #tpu.memory_space<vmem>>, %arg6: memref<8x128xf32, #tpu.memory_space<vmem>>) attributes {dimension_semantics = [], scalar_prefetch = 0 : i64, scratch_operands = 0 : i64, tpu.core_type = #tpu.core_type<tc>} {
    %c0 = arith.constant 0 : index
    %c0_0 = arith.constant 0 : index
    %0 = vector.load %arg0[%c0, %c0_0] : memref<8x128xf32, #tpu.memory_space<vmem>>, vector<8x128xf32>
    %c0_1 = arith.constant 0 : index
    %c0_2 = arith.constant 0 : index
    %1 = vector.load %arg1[%c0_1, %c0_2] : memref<8x10xf32, #tpu.memory_space<vmem>>, vector<8x10xf32>
    %c0_3 = arith.constant 0 : index
    %c0_4 = arith.constant 0 : index
    %2 = vector.load %arg2[%c0_3, %c0_4] : memref<10x384xf32, #tpu.memory_space<vmem>>, vector<10x384xf32>
    %cst = arith.constant dense<0.000000e+00> : vector<8x384xf32>
    %3 = tpu.matmul %1, %2, %cst {dimension_numbers = #tpu.dot_dimension_numbers<[1], [0], [0], [1], [0, 0, 1, 1], [], []>} : vector<8x10xf32>, vector<10x384xf32>, vector<8x384xf32> -> vector<8x384xf32>
    %c0_5 = arith.constant 0 : index
    %c0_6 = arith.constant 0 : index
    %4 = vector.load %arg5[%c0_5, %c0_6] : memref<1x384xf32, #tpu.memory_space<vmem>>, vector<1x384xf32>
    %5 = vector.broadcast %4 : vector<1x384xf32> to vector<8x384xf32>
    %6 = arith.addf %3, %5 : vector<8x384xf32>
    %c0_7 = arith.constant 0 : index
    %c0_8 = arith.constant 0 : index
    %7 = vector.load %arg3[%c0_7, %c0_8] : memref<128x256xf32, #tpu.memory_space<vmem>>, vector<128x256xf32>
    %cst_9 = arith.constant dense<0.000000e+00> : vector<8x256xf32>
    %8 = tpu.matmul %0, %7, %cst_9 {dimension_numbers = #tpu.dot_dimension_numbers<[1], [0], [0], [1], [0, 0, 1, 1], [], []>} : vector<8x128xf32>, vector<128x256xf32>, vector<8x256xf32> -> vector<8x256xf32>
    %9 = vector.extract_strided_slice %6 {offsets = [0, 0], sizes = [8, 128], strides = [1, 1]} : vector<8x384xf32> to vector<8x128xf32>
    %10 = vector.extract_strided_slice %8 {offsets = [0, 0], sizes = [8, 128], strides = [1, 1]} : vector<8x256xf32> to vector<8x128xf32>
    %11 = arith.addf %9, %10 : vector<8x128xf32>
    %12 = arith.negf %11 : vector<8x128xf32>
    %13 = math.exp %12 : vector<8x128xf32>
    %cst_10 = arith.constant 1.000000e+00 : f32
    %14 = vector.broadcast %cst_10 : f32 to vector<8x128xf32>
    %15 = arith.addf %14, %13 : vector<8x128xf32>
    %16 = arith.divf %14, %15 : vector<8x128xf32>
    %17 = vector.extract_strided_slice %6 {offsets = [0, 128], sizes = [8, 128], strides = [1, 1]} : vector<8x384xf32> to vector<8x128xf32>
    %18 = vector.extract_strided_slice %8 {offsets = [0, 128], sizes = [8, 128], strides = [1, 1]} : vector<8x256xf32> to vector<8x128xf32>
    %19 = arith.addf %17, %18 : vector<8x128xf32>
    %20 = arith.negf %19 : vector<8x128xf32>
    %21 = math.exp %20 : vector<8x128xf32>
    %cst_11 = arith.constant 1.000000e+00 : f32
    %22 = vector.broadcast %cst_11 : f32 to vector<8x128xf32>
    %23 = arith.addf %22, %21 : vector<8x128xf32>
    %24 = arith.divf %22, %23 : vector<8x128xf32>
    %25 = vector.extract_strided_slice %6 {offsets = [0, 256], sizes = [8, 128], strides = [1, 1]} : vector<8x384xf32> to vector<8x128xf32>
    %26 = arith.mulf %0, %24 : vector<8x128xf32>
    %c0_12 = arith.constant 0 : index
    %c0_13 = arith.constant 0 : index
    %27 = vector.load %arg4[%c0_12, %c0_13] : memref<128x128xf32, #tpu.memory_space<vmem>>, vector<128x128xf32>
    %cst_14 = arith.constant dense<0.000000e+00> : vector<8x128xf32>
    %28 = tpu.matmul %26, %27, %cst_14 {dimension_numbers = #tpu.dot_dimension_numbers<[1], [0], [0], [1], [0, 0, 1, 1], [], []>} : vector<8x128xf32>, vector<128x128xf32>, vector<8x128xf32> -> vector<8x128xf32>
    %29 = arith.addf %25, %28 : vector<8x128xf32>
    %cst_15 = arith.constant 1.000000e+00 : f32
    %30 = vector.broadcast %cst_15 : f32 to vector<8x128xf32>
    %31 = arith.subf %30, %16 : vector<8x128xf32>
    %32 = arith.mulf %31, %29 : vector<8x128xf32>
    %33 = arith.mulf %16, %0 : vector<8x128xf32>
    %34 = arith.addf %32, %33 : vector<8x128xf32>
    %c0_16 = arith.constant 0 : index
    %c0_17 = arith.constant 0 : index
    %35 = vector.load %arg6[%c0_16, %c0_17] : memref<8x128xf32, #tpu.memory_space<vmem>>, vector<8x128xf32>
    tpu.vector_store %arg6[%c0_16, %c0_17], %34 {strides = array<i32>} : memref<8x128xf32, #tpu.memory_space<vmem>>, vector<8x128xf32>,
    return
  }
}

</mosaic_0001>

<llo_original>
// kernel: gru_unit_cluster_forward.1
$region0: #{gru_unit_cluster_forward.1}
  #allocation0 [shape = 'u32[]', space=smem, size = 0x4, offset = 0x4, fixed_abs, tag = 'smem constant byte address 0x4 - core index']
  #allocation1 [shape = 'u32[72,128]{1,0:T(1,128)}', space=vmem, size = 0x9000, scoped, tag = 'internal scratch']
  %s0 = inlined_call_operand.vmem [shape: f32[8,128], index: 0, kind: input, shape index: {}]
  %s1 = inlined_call_operand.vmem [shape: f32[8,10], index: 1, kind: input, shape index: {}]
  %s2 = inlined_call_operand.hbm [shape: f32[10,384], index: 2, kind: input, shape index: {}]
  %s3 = inlined_call_operand.hbm [shape: f32[128,256], index: 3, kind: input, shape index: {}]
  %s4 = inlined_call_operand.hbm [shape: f32[128,128], index: 4, kind: input, shape index: {}]
  %s5 = inlined_call_operand.vmem [shape: f32[1,384], index: 5, kind: input, shape index: {}]
  %s6 = inlined_call_operand.hbm [shape: f32[8,128], index: 6, kind: output, shape index: {}]
  %s7 = sld [smem:[#allocation0]]
  $region46: #{gru_unit_cluster_forward.1} parent=0
    _
  %s9 = ssub.s32 1, %s7
  %s10 = scalar_select 0, %s9, %s7
  $region1: #{gru_unit_cluster_forward.1} parent=0
    #allocation2 [shape = 'u8[24576]{0}', space=vmem, size = 0x6000, scoped, tag = 'input window, operand 2, single buffered']
    #allocation3 [shape = 's32[1]{0}', space=sflag, size = 0x4, scoped, tag = 'scoped memory for gru_unit_cluster_forward.1']
    #allocation4 [shape = 's32[1]{0}', space=sflag, size = 0x4, scoped, tag = 'scoped memory for gru_unit_cluster_forward.1']
    #allocation5 [shape = 'u8[131072]{0}', space=vmem, size = 0x20000, scoped, tag = 'input window, operand 3, single buffered']
    #allocation6 [shape = 's32[1]{0}', space=sflag, size = 0x4, scoped, tag = 'scoped memory for gru_unit_cluster_forward.1']
    #allocation7 [shape = 'u8[65536]{0}', space=vmem, size = 0x10000, scoped, tag = 'input window, operand 4, single buffered']
    #allocation8 [shape = 'u8[4096]{0}', space=vmem, size = 0x1000, scoped, tag = 'output window, operand 0, single buffered']
    %11 = vsyncpa [#allocation3], 0
    %12 = vsyncpa [#allocation6], 0
    %13 = vsyncpa [#allocation4], 0
    // Predicated region
    $region2: #{gru_unit_cluster_forward.1} parent=1 // pred_check
      _
    $region3: #{gru_unit_cluster_forward.1} parent=1 // pred_check_branch
      %15 = sbr.rel (0) target = $region5
    $region4: #{gru_unit_cluster_forward.1} parent=1 // pred_region
      _
    $region5: #{gru_unit_cluster_forward.1} parent=1 // pred_fallthru
      _
    // Predicated region
    $region6: #{gru_unit_cluster_forward.1} parent=1 // pred_check
      _
    $region7: #{gru_unit_cluster_forward.1} parent=1 // pred_check_branch
      %17 = sbr.rel (0) target = $region9
    $region8: #{gru_unit_cluster_forward.1} parent=1 // pred_region
      _
    $region9: #{gru_unit_cluster_forward.1} parent=1 // pred_fallthru
      _
    // Predicated region
    $region10: #{gru_unit_cluster_forward.1} parent=1 // pred_check
      _
    $region11: #{gru_unit_cluster_forward.1} parent=1 // pred_check_branch
      %19 = sbr.rel (0) target = $region13
    $region12: #{gru_unit_cluster_forward.1} parent=1 // pred_region
      %21 = vsyncadd [#allocation3], 0
      %s22 = sshll.u32 %s2, 4
      %s23 = int_to_ptr.hbm [resolvable:$true] %s22
      %s24 = sshll.u32 [#allocation2], 4
      %s25 = int_to_ptr.vmem [resolvable:$true] %s24
      %30 = dma.hbm_to_vmem [thread:$0]  %s23, 768, %s25, [#allocation3], 384, 384, 24
    $region13: #{gru_unit_cluster_forward.1} parent=1 // pred_fallthru
      _
    // Predicated region
    $region14: #{gru_unit_cluster_forward.1} parent=1 // pred_check
      _
    $region15: #{gru_unit_cluster_forward.1} parent=1 // pred_check_branch
      %32 = sbr.rel (0) target = $region17
    $region16: #{gru_unit_cluster_forward.1} parent=1 // pred_region
      %34 = vsyncadd [#allocation6], 0
      %s35 = sshll.u32 %s3, 4
      %s36 = int_to_ptr.hbm [resolvable:$true] %s35
      %s37 = sshll.u32 [#allocation5], 4
      %s38 = int_to_ptr.vmem [resolvable:$true] %s37
      %43 = dma.hbm_to_vmem [thread:$0]  %s36, 4096, %s38, [#allocation6], 256, 256, 16
    $region17: #{gru_unit_cluster_forward.1} parent=1 // pred_fallthru
      _
    // Predicated region
    $region18: #{gru_unit_cluster_forward.1} parent=1 // pred_check
      _
    $region19: #{gru_unit_cluster_forward.1} parent=1 // pred_check_branch
      %45 = sbr.rel (0) target = $region21
    $region20: #{gru_unit_cluster_forward.1} parent=1 // pred_region
      %47 = vsyncadd [#allocation6], 0
      %s48 = sshll.u32 %s4, 4
      %s49 = int_to_ptr.hbm [resolvable:$true] %s48
      %s50 = sshll.u32 [#allocation7], 4
      %s51 = int_to_ptr.vmem [resolvable:$true] %s50
      %56 = dma.hbm_to_vmem [thread:$0]  %s49, 2048, %s51, [#allocation6], 128, 128, 8
    $region21: #{gru_unit_cluster_forward.1} parent=1 // pred_fallthru
      _
    // Predicated region
    $region22: #{gru_unit_cluster_forward.1} parent=1 // pred_check
      _
    $region23: #{gru_unit_cluster_forward.1} parent=1 // pred_check_branch
      %58 = sbr.rel (0) target = $region25
    $region24: #{gru_unit_cluster_forward.1} parent=1 // pred_region
      _
    $region25: #{gru_unit_cluster_forward.1} parent=1 // pred_fallthru
      _
    // Predicated region
    $region26: #{gru_unit_cluster_forward.1} parent=1 // pred_check
      _
    $region27: #{gru_unit_cluster_forward.1} parent=1 // pred_check_branch
      %60 = sbr.rel (0) target = $region29
    $region28: #{gru_unit_cluster_forward.1} parent=1 // pred_region
      %62 = dma.done [#allocation3], 768
    $region29: #{gru_unit_cluster_forward.1} parent=1 // pred_fallthru
      _
    // Predicated region
    $region30: #{gru_unit_cluster_forward.1} parent=1 // pred_check
      _
    $region31: #{gru_unit_cluster_forward.1} parent=1 // pred_check_branch
      %64 = sbr.rel (0) target = $region33
    $region32: #{gru_unit_cluster_forward.1} parent=1 // pred_region
      %66 = dma.done [#allocation6], 4096
    $region33: #{gru_unit_cluster_forward.1} parent=1 // pred_fallthru
      _
    // Predicated region
    $region34: #{gru_unit_cluster_forward.1} parent=1 // pred_check
      _
    $region35: #{gru_unit_cluster_forward.1} parent=1 // pred_check_branch
      %68 = sbr.rel (0) target = $region37
    $region36: #{gru_unit_cluster_forward.1} parent=1 // pred_region
      %70 = dma.done [#allocation6], 2048
    $region37: #{gru_unit_cluster_forward.1} parent=1 // pred_fallthru
      _
    %v71 = vld [vmem:[%s0] sm:$0xff]
    %v72 = vld [vmem:[%s1] sm:$0xff]
    %v73 = vld [vmem:[#allocation2] sm:$0xff]
    %v74 = vld [vmem:[#allocation2 + $0x8] sm:$0xff]
    %v75 = vld [vmem:[#allocation2 + $0x10] sm:$0xff]
    %v76 = vld [vmem:[#allocation2 + $0x18] sm:$0x3]
    %v77 = vld [vmem:[#allocation2 + $0x20] sm:$0x3]
    %v78 = vld [vmem:[#allocation2 + $0x28] sm:$0x3]
    %v79 = vld [vmem:[%s5] sm:$0x7]
    %v81 = vperm.slane %v79, 0
    %v82 = vperm.slane %v79, 1
    %v83 = vperm.slane %v79, 2
    %vm87 = vcmask 80896
    %v89 = vsel %vm87, %v72, 0
    %vm91 = vcmask 1041408
    %v93 = vsel %vm91, %v76, 0
    %v96 = vsel %vm91, %v77, 0
    %v99 = vsel %vm91, %v78, 0
    %101 = vmatpush.msra.mxu0 0.0
    %102 = vmatpush.msra.mxu0 0.0
    %103 = vmatpush.msra.mxu0 0.0
    %104 = vmatpush.msra.mxu0 0.0
    %105 = vmatpush.msra.mxu0 0.0
    %106 = vmatpush.msra.mxu0 0.0
    %107 = vmatpush.msra.mxu0 0.0
    %108 = vmatpush.msra.mxu0 0.0
    %109 = vmatpush.msra.mxu0 0.0
    %110 = vmatpush.msra.mxu0 0.0
    %111 = vmatpush.msra.mxu0 0.0
    %112 = vmatpush.msra.mxu0 0.0
    %113 = vmatpush.msra.mxu0 0.0
    %114 = vmatpush.msra.mxu0 0.0
    %115 = vmatpush.msra.mxu0 %v93
    %116 = vmatpush.msra.mxu0 %v73
    %117 = vmatmul.f32.gmra.mxu0 %v89
    %v118 = vpop.f32.mrf.mxu0
    %v119 = vadd.f32 %v81, %v118
    %120 = vdwg.mxu0
    %121 = vmatpush.msra.mxu0 0.0
    %122 = vmatpush.msra.mxu0 0.0
    %123 = vmatpush.msra.mxu0 0.0
    %124 = vmatpush.msra.mxu0 0.0
    %125 = vmatpush.msra.mxu0 0.0
    %126 = vmatpush.msra.mxu0 0.0
    %127 = vmatpush.msra.mxu0 0.0
    %128 = vmatpush.msra.mxu0 0.0
    %129 = vmatpush.msra.mxu0 0.0
    %130 = vmatpush.msra.mxu0 0.0
    %131 = vmatpush.msra.mxu0 0.0
    %132 = vmatpush.msra.mxu0 0.0
    %133 = vmatpush.msra.mxu0 0.0
    %134 = vmatpush.msra.mxu0 0.0
    %135 = vmatpush.msra.mxu0 %v96
    %136 = vmatpush.msra.mxu0 %v74
    %137 = vmatmul.f32.gmra.mxu0 %v89
    %v138 = vpop.f32.mrf.mxu0
    %v139 = vadd.f32 %v82, %v138
    %140 = vdwg.mxu0
    %141 = vmatpush.msra.mxu0 0.0
    %142 = vmatpush.msra.mxu0 0.0
    %143 = vmatpush.msra.mxu0 0.0
    %144 = vmatpush.msra.mxu0 0.0
    %145 = vmatpush.msra.mxu0 0.0
    %146 = vmatpush.msra.mxu0 0.0
    %147 = vmatpush.msra.mxu0 0.0
    %148 = vmatpush.msra.mxu0 0.0
    %149 = vmatpush.msra.mxu0 0.0
    %150 = vmatpush.msra.mxu0 0.0
    %151 = vmatpush.msra.mxu0 0.0
    %152 = vmatpush.msra.mxu0 0.0
    %153 = vmatpush.msra.mxu0 0.0
    %154 = vmatpush.msra.mxu0 0.0
    %155 = vmatpush.msra.mxu0 %v99
    %156 = vmatpush.msra.mxu0 %v75
    %157 = vmatmul.f32.gmra.mxu0 %v89
    %v158 = vpop.f32.mrf.mxu0
    %v159 = vadd.f32 %v83, %v158
    %160 = vdwg.mxu0
    %v161 = vld [vmem:[#allocation5] sm:$0xff]
    %v162 = vld [vmem:[#allocation5 + $0x8] sm:$0xff]
    %v163 = vld [vmem:[#allocation5 + $0x10] sm:$0xff]
    %v164 = vld [vmem:[#allocation5 + $0x18] sm:$0xff]
    %v165 = vld [vmem:[#allocation5 + $0x20] sm:$0xff]
    %v166 = vld [vmem:[#allocation5 + $0x28] sm:$0xff]
    %v167 = vld [vmem:[#allocation5 + $0x30] sm:$0xff]
    %v168 = vld [vmem:[#allocation5 + $0x38] sm:$0xff]
    %v169 = vld [vmem:[#allocation5 + $0x40] sm:$0xff]
    %v170 = vld [vmem:[#allocation5 + $0x48] sm:$0xff]
    %v171 = vld [vmem:[#allocation5 + $0x50] sm:$0xff]
    %v172 = vld [vmem:[#allocation5 + $0x58] sm:$0xff]
    %v173 = vld [vmem:[#allocation5 + $0x60] sm:$0xff]
    %v174 = vld [vmem:[#allocation5 + $0x68] sm:$0xff]
    %v175 = vld [vmem:[#allocation5 + $0x70] sm:$0xff]
    %v176 = vld [vmem:[#allocation5 + $0x78] sm:$0xff]
    %v177 = vld [vmem:[#allocation5 + $0x80] sm:$0xff]
    %v178 = vld [vmem:[#allocation5 + $0x88] sm:$0xff]
    %v179 = vld [vmem:[#allocation5 + $0x90] sm:$0xff]
    %v180 = vld [vmem:[#allocation5 + $0x98] sm:$0xff]
    %v181 = vld [vmem:[#allocation5 + $0xa0] sm:$0xff]
    %v182 = vld [vmem:[#allocation5 + $0xa8] sm:$0xff]
    %v183 = vld [vmem:[#allocation5 + $0xb0] sm:$0xff]
    %v184 = vld [vmem:[#allocation5 + $0xb8] sm:$0xff]
    %v185 = vld [vmem:[#allocation5 + $0xc0] sm:$0xff]
    %v186 = vld [vmem:[#allocation5 + $0xc8] sm:$0xff]
    %v187 = vld [vmem:[#allocation5 + $0xd0] sm:$0xff]
    %v188 = vld [vmem:[#allocation5 + $0xd8] sm:$0xff]
    %v189 = vld [vmem:[#allocation5 + $0xe0] sm:$0xff]
    %v190 = vld [vmem:[#allocation5 + $0xe8] sm:$0xff]
    %v191 = vld [vmem:[#allocation5 + $0xf0] sm:$0xff]
    %v192 = vld [vmem:[#allocation5 + $0xf8] sm:$0xff]
    %193 = vmatpush.msra.mxu0 %v191
    %194 = vmatpush.msra.mxu0 %v189
    %195 = vmatpush.msra.mxu0 %v187
    %196 = vmatpush.msra.mxu0 %v185
    %197 = vmatpush.msra.mxu0 %v183
    %198 = vmatpush.msra.mxu0 %v181
    %199 = vmatpush.msra.mxu0 %v179
    %200 = vmatpush.msra.mxu0 %v177
    %201 = vmatpush.msra.mxu0 %v175
    %202 = vmatpush.msra.mxu0 %v173
    %203 = vmatpush.msra.mxu0 %v171
    %204 = vmatpush.msra.mxu0 %v169
    %205 = vmatpush.msra.mxu0 %v167
    %206 = vmatpush.msra.mxu0 %v165
    %207 = vmatpush.msra.mxu0 %v163
    %208 = vmatpush.msra.mxu0 %v161
    %209 = vmatmul.f32.gmra.mxu0 %v71
    %v210 = vpop.f32.mrf.mxu0
    %v211 = vadd.f32 0.0, %v210
    %212 = vdwg.mxu0
    %213 = vmatpush.msra.mxu0 %v192
    %214 = vmatpush.msra.mxu0 %v190
    %215 = vmatpush.msra.mxu0 %v188
    %216 = vmatpush.msra.mxu0 %v186
    %217 = vmatpush.msra.mxu0 %v184
    %218 = vmatpush.msra.mxu0 %v182
    %219 = vmatpush.msra.mxu0 %v180
    %220 = vmatpush.msra.mxu0 %v178
    %221 = vmatpush.msra.mxu0 %v176
    %222 = vmatpush.msra.mxu0 %v174
    %223 = vmatpush.msra.mxu0 %v172
    %224 = vmatpush.msra.mxu0 %v170
    %225 = vmatpush.msra.mxu0 %v168
    %226 = vmatpush.msra.mxu0 %v166
    %227 = vmatpush.msra.mxu0 %v164
    %228 = vmatpush.msra.mxu0 %v162
    %229 = vmatmul.f32.gmra.mxu0 %v71
    %v230 = vpop.f32.mrf.mxu0
    %v231 = vadd.f32 0.0, %v230
    %232 = vdwg.mxu0
    %v233 = vadd.f32 %v119, %v211
    %v234 = vxor.u32 %v233, 2147483648
    %v235 = vmul.f32 %v234, 1.442695
    %v236 = vpow.pop %v235
    %v237 = vadd.f32 %v236, 1.0
    %v238 = vrcp.pop %v237
    %v239 = vmul.f32 %v237, %v238
    %v240 = vsub.f32 1.0, %v239
    %v241 = vmul.f32 %v238, %v240
    %v242 = vadd.f32 %v238, %v241
    %vm243 = vweird.f32 %v237
    %vm244 = vweird.f32 %v238
    %vm245 = vmor %vm243, %vm244
    %v246 = vsel %vm245, %v238, %v242
    %v247 = vand.u32 2147483647, %v237
    %vm248 = vcmp.eq.f32.partialorder %v247, 8.507059e+37
    %v249 = vand.u32 %v237, 2147483648
    %v250 = vor.u32 1.1754944e-38, %v249
    %v251 = vsel %vm248, %v250, %v246
    %v252 = vmul.f32 1.0, %v251
    %v253 = vadd.f32 %v139, %v231
    %v254 = vxor.u32 %v253, 2147483648
    %v255 = vmul.f32 %v254, 1.442695
    %v256 = vpow.pop %v255
    %v257 = vadd.f32 %v256, 1.0
    %v258 = vrcp.pop %v257
    %v259 = vmul.f32 %v257, %v258
    %v260 = vsub.f32 1.0, %v259
    %v261 = vmul.f32 %v258, %v260
    %v262 = vadd.f32 %v258, %v261
    %vm263 = vweird.f32 %v257
    %vm264 = vweird.f32 %v258
    %vm265 = vmor %vm263, %vm264
    %v266 = vsel %vm265, %v258, %v262
    %v267 = vand.u32 2147483647, %v257
    %vm268 = vcmp.eq.f32.partialorder %v267, 8.507059e+37
    %v269 = vand.u32 %v257, 2147483648
    %v270 = vor.u32 1.1754944e-38, %v269
    %v271 = vsel %vm268, %v270, %v266
    %v272 = vmul.f32 1.0, %v271
    %v273 = vmul.f32 %v71, %v272
    %v274 = vld [vmem:[#allocation7] sm:$0xff]
    %v275 = vld [vmem:[#allocation7 + $0x8] sm:$0xff]
    %v276 = vld [vmem:[#allocation7 + $0x10] sm:$0xff]
    %v277 = vld [vmem:[#allocation7 + $0x18] sm:$0xff]
    %v278 = vld [vmem:[#allocation7 + $0x20] sm:$0xff]
    %v279 = vld [vmem:[#allocation7 + $0x28] sm:$0xff]
    %v280 = vld [vmem:[#allocation7 + $0x30] sm:$0xff]
    %v281 = vld [vmem:[#allocation7 + $0x38] sm:$0xff]
    %v282 = vld [vmem:[#allocation7 + $0x40] sm:$0xff]
    %v283 = vld [vmem:[#allocation7 + $0x48] sm:$0xff]
    %v284 = vld [vmem:[#allocation7 + $0x50] sm:$0xff]
    %v285 = vld [vmem:[#allocation7 + $0x58] sm:$0xff]
    %v286 = vld [vmem:[#allocation7 + $0x60] sm:$0xff]
    %v287 = vld [vmem:[#allocation7 + $0x68] sm:$0xff]
    %v288 = vld [vmem:[#allocation7 + $0x70] sm:$0xff]
    %v289 = vld [vmem:[#allocation7 + $0x78] sm:$0xff]
    %290 = vmatpush.msra.mxu0 %v289
    %291 = vmatpush.msra.mxu0 %v288
    %292 = vmatpush.msra.mxu0 %v287
    %293 = vmatpush.msra.mxu0 %v286
    %294 = vmatpush.msra.mxu0 %v285
    %295 = vmatpush.msra.mxu0 %v284
    %296 = vmatpush.msra.mxu0 %v283
    %297 = vmatpush.msra.mxu0 %v282
    %298 = vmatpush.msra.mxu0 %v281
    %299 = vmatpush.msra.mxu0 %v280
    %300 = vmatpush.msra.mxu0 %v279
    %301 = vmatpush.msra.mxu0 %v278
    %302 = vmatpush.msra.mxu0 %v277
    %303 = vmatpush.msra.mxu0 %v276
    %304 = vmatpush.msra.mxu0 %v275
    %305 = vmatpush.msra.mxu0 %v274
    %306 = vmatmul.f32.gmra.mxu0 %v273
    %v307 = vpop.f32.mrf.mxu0
    %v308 = vadd.f32 0.0, %v307
    %309 = vdwg.mxu0
    %v310 = vadd.f32 %v159, %v308
    %v311 = vsub.f32 1.0, %v252
    %v312 = vmul.f32 %v311, %v310
    %v313 = vmul.f32 %v252, %v71
    %v314 = vadd.f32 %v312, %v313
    %315 = vst [vmem:[#allocation8] sm:$0xff] %v314
    // Predicated region
    $region38: #{gru_unit_cluster_forward.1} parent=1 // pred_check
      _
    $region39: #{gru_unit_cluster_forward.1} parent=1 // pred_check_branch
      %317 = sbr.rel (0) target = $region41
    $region40: #{gru_unit_cluster_forward.1} parent=1 // pred_region
      %319 = vsyncadd [#allocation4], 0
      %s321 = sshll.u32 [#allocation8], 4
      %s322 = int_to_ptr.vmem [resolvable:$true] %s321
      %s323 = sshll.u32 %s6, 4
      %s324 = int_to_ptr.hbm [resolvable:$true] %s323
      %326 = dma.vmem_to_hbm [thread:$0]  %s322, 128, %s324, [#allocation4]
    $region41: #{gru_unit_cluster_forward.1} parent=1 // pred_fallthru
      _
    // Predicated region
    $region42: #{gru_unit_cluster_forward.1} parent=1 // pred_check
      _
    $region43: #{gru_unit_cluster_forward.1} parent=1 // pred_check_branch
      %328 = sbr.rel (0) target = $region45
    $region44: #{gru_unit_cluster_forward.1} parent=1 // pred_region
      %330 = dma.done [#allocation4], 128
    $region45: #{gru_unit_cluster_forward.1} parent=1 // pred_fallthru
      _
    %331 = vsyncpa [#allocation3], 1
    %332 = vsyncpa [#allocation6], 1
    %333 = vsyncpa [#allocation4], 1

</llo_original>
